<compile_context>
chip_gen: v7x
topology: tpu7x:2x2x1
jax: 0.10.0
libtpu: 0.0.40
codegen_flags: <defaults>
</compile_context>

<pallas_src>
import functools

import jax
import jax.numpy as jnp
from jax import lax
from jax.experimental import pallas as pl
from jax.experimental.pallas import tpu as pltpu

EPS = 1e-5  # PyTorch default eps for InstanceNorm2d and BatchNorm2d


def _ibn_rownorm_kernel(x_ref, p_ref, o_ref):
    """One tile of rows. p_ref columns: [flag, bn_mean, bn_inv, gamma, beta, 0, 0, 0].

    flag==1 -> use in-kernel row statistics (InstanceNorm channels)
    flag==0 -> use precomputed batch statistics (BatchNorm channels)
    """
    x = x_ref[...].astype(jnp.float32)      # per-tile upcast (no-op for f32 inputs)
    p = p_ref[...]                          # (tile_rows, 8) fp32 (params stay fp32)
    use_row = p[:, 0:1] > 0.5
    bn_mean = p[:, 1:2]
    bn_inv = p[:, 2:3]
    gamma = p[:, 3:4]
    beta = p[:, 4:5]

    # Row statistics (XLU/VPU work; the kernel is HBM-bound, so computing them
    # even for the BatchNorm rows where the select discards them is free).
    mean_r = jnp.mean(x, axis=-1, keepdims=True)
    xc = x - mean_r
    var_r = jnp.mean(xc * xc, axis=-1, keepdims=True)  # biased variance
    inv_r = lax.rsqrt(var_r + EPS)

    mean = jnp.where(use_row, mean_r, bn_mean)
    inv = jnp.where(use_row, inv_r, bn_inv)
    scale = inv * gamma                     # fold gamma into the scale: one less full-tile mul
    y = (x - mean) * scale + beta
    o_ref[...] = y.astype(o_ref.dtype)


def _row_tile(rows, row_bytes):
    """Row tile: multiple of 8, ~2 MiB per buffer (fits v5e/v7x scoped VMEM
    with double buffering), never larger than the 8-padded row count."""
    tr = max(8, min((2 * 1024 * 1024) // max(row_bytes, 1), 1024))
    tr = max(8, (tr // 8) * 8)
    rows8 = ((rows + 7) // 8) * 8
    return min(tr, rows8)


def ibn_forward(x, in_gamma, in_beta, bn_gamma, bn_beta, *, ratio=0.5):
    """IBN forward. x: (N, C, H, W). BN half uses training-mode batch statistics."""
    N, C, H, W = x.shape
    half = int(C * ratio)
    c2 = C - half
    L = H * W
    R = N * C

    # ---- BatchNorm-half batch statistics (per channel over N, H, W) ----
    # Small fused XLA reduction: reads the BN half without any transpose or
    # materialized split copy; output is just (c2,) scalars per channel.
    x2 = x[:, half:].astype(jnp.float32)
    m2 = jnp.mean(x2, axis=(0, 2, 3))
    v2 = jnp.mean(jnp.square(x2 - m2.reshape(1, c2, 1, 1)), axis=(0, 2, 3))
    inv2 = lax.rsqrt(v2 + EPS)

    # ---- Per-row fp32 parameter table (row = n*C + c), tiny ----
    flag = jnp.concatenate([jnp.ones((half,), jnp.float32), jnp.zeros((c2,), jnp.float32)])
    bn_m = jnp.concatenate([jnp.zeros((half,), jnp.float32), m2])
    bn_i = jnp.concatenate([jnp.ones((half,), jnp.float32), inv2])
    gam = jnp.concatenate([in_gamma, bn_gamma]).astype(jnp.float32)
    bet = jnp.concatenate([in_beta, bn_beta]).astype(jnp.float32)
    zero = jnp.zeros((C,), jnp.float32)
    p_c = jnp.stack([flag, bn_m, bn_i, gam, bet, zero, zero, zero], axis=-1)  # (C, 8)
    params = jnp.broadcast_to(p_c[None], (N, C, 8)).reshape(R, 8)             # (N*C, 8)

    # ---- Row view of x: free reshape of the contiguous NCHW tensor ----
    xr = x.reshape(R, L)

    tr = _row_tile(R, L * x.dtype.itemsize)
    r_pad = ((R + tr - 1) // tr) * tr
    if r_pad != R:
        xr = jnp.pad(xr, ((0, r_pad - R), (0, 0)))
        pad_p = jnp.zeros((r_pad - R, 8), jnp.float32).at[:, 0].set(1.0)
        params = jnp.concatenate([params, pad_p], axis=0)

    out = pl.pallas_call(
        _ibn_rownorm_kernel,
        out_shape=jax.ShapeDtypeStruct((r_pad, L), x.dtype),
        grid=(r_pad // tr,),
        in_specs=[
            pl.BlockSpec((tr, L), lambda i: (i, 0)),
            pl.BlockSpec((tr, 8), lambda i: (i, 0)),
        ],
        out_specs=pl.BlockSpec((tr, L), lambda i: (i, 0)),
        compiler_params=pltpu.CompilerParams(
            dimension_semantics=("parallel",),  # rows independent -> megacore-shardable
        ),
    )(xr, params)

    return out[:R].reshape(N, C, H, W)


def _reference_ibn(x, in_gamma, in_beta, bn_gamma, bn_beta, *, ratio=0.5):
    """Pure-JAX reference mirroring PyTorch IBN forward (BN in training mode)."""
    N, C, H, W = x.shape
    half = int(C * ratio)
    x1, x2 = x[:, :half], x[:, half:]

    m1 = jnp.mean(x1, axis=(2, 3), keepdims=True)
    v1 = jnp.mean((x1 - m1) ** 2, axis=(2, 3), keepdims=True)
    o1 = (x1 - m1) / jnp.sqrt(v1 + EPS)
    o1 = o1 * in_gamma.reshape(1, half, 1, 1) + in_beta.reshape(1, half, 1, 1)

    m2 = jnp.mean(x2, axis=(0, 2, 3), keepdims=True)
    v2 = jnp.mean((x2 - m2) ** 2, axis=(0, 2, 3), keepdims=True)
    o2 = (x2 - m2) / jnp.sqrt(v2 + EPS)
    o2 = o2 * bn_gamma.reshape(1, -1, 1, 1) + bn_beta.reshape(1, -1, 1, 1)

    return jnp.concatenate([o1, o2], axis=1)


if __name__ == "__main__":
    # Shapes consistent with IBN(planes=4): N=2, C=4, H=W=16, half=2.
    N, C, H, W = 2, 4, 16, 16
    ratio = 0.5
    half = int(C * ratio)
    c2 = C - half

    key = jax.random.PRNGKey(0)
    x = jax.random.normal(key, (N, C, H, W), dtype=jnp.float32)

    # Deterministic, non-trivial affine parameters (exercise the gamma/beta path).
    in_gamma = 1.00 + 0.10 * jnp.arange(half, dtype=jnp.float32)
    in_beta = -0.05 + 0.02 * jnp.arange(half, dtype=jnp.float32)
    bn_gamma = 0.90 + 0.05 * jnp.arange(c2, dtype=jnp.float32)
    bn_beta = 0.03 * jnp.arange(c2, dtype=jnp.float32) - 0.01

    fwd = jax.jit(functools.partial(ibn_forward, ratio=ratio))
    out = jax.block_until_ready(fwd(x, in_gamma, in_beta, bn_gamma, bn_beta))

    ref = _reference_ibn(x, in_gamma, in_beta, bn_gamma, bn_beta, ratio=ratio)
    assert out.shape == (N, C, H, W)
    assert jnp.allclose(out, ref, atol=1e-5, rtol=1e-5), "mismatch vs reference"

    # TODO(synk): BatchNorm2d running_mean/running_var momentum update is stateful
    # bookkeeping and is not modeled; training-mode forward output is unaffected.
    print("KERNEL_OK")
</pallas_src>

<mosaic_0001>
module attributes {stable_mosaic.version = 11 : i64} {
  func.func @_ibn_rownorm_kernel(%arg0: i32, %arg1: memref<8x256xf32, #tpu.memory_space<vmem>>, %arg2: memref<8x8xf32, #tpu.memory_space<vmem>>, %arg3: memref<8x256xf32, #tpu.memory_space<vmem>>) attributes {dimension_semantics = [#tpu.dimension_semantics<parallel>], iteration_bounds = array<i64: 1>, scalar_prefetch = 0 : i64, scratch_operands = 0 : i64, tpu.core_type = #tpu.core_type<tc>, window_params = [{transform_indices = @transform_0, window_bounds = array<i64: 8, 256>}, {transform_indices = @transform_1, window_bounds = array<i64: 8, 8>}, {transform_indices = @transform_2, window_bounds = array<i64: 8, 256>}]} {
    %c0 = arith.constant 0 : index
    %c0_0 = arith.constant 0 : index
    %0 = vector.load %arg1[%c0, %c0_0] : memref<8x256xf32, #tpu.memory_space<vmem>>, vector<8x256xf32>
    %c0_1 = arith.constant 0 : index
    %c0_2 = arith.constant 0 : index
    %1 = vector.load %arg2[%c0_1, %c0_2] : memref<8x8xf32, #tpu.memory_space<vmem>>, vector<8x8xf32>
    %2 = vector.extract_strided_slice %1 {offsets = [0, 0], sizes = [8, 1], strides = [1, 1]} : vector<8x8xf32> to vector<8x1xf32>
    %cst = arith.constant 5.000000e-01 : f32
    %3 = vector.broadcast %cst : f32 to vector<8x1xf32>
    %4 = arith.cmpf ogt, %2, %3 : vector<8x1xf32>
    %5 = vector.extract_strided_slice %1 {offsets = [0, 1], sizes = [8, 1], strides = [1, 1]} : vector<8x8xf32> to vector<8x1xf32>
    %6 = vector.extract_strided_slice %1 {offsets = [0, 2], sizes = [8, 1], strides = [1, 1]} : vector<8x8xf32> to vector<8x1xf32>
    %7 = vector.extract_strided_slice %1 {offsets = [0, 3], sizes = [8, 1], strides = [1, 1]} : vector<8x8xf32> to vector<8x1xf32>
    %8 = vector.extract_strided_slice %1 {offsets = [0, 4], sizes = [8, 1], strides = [1, 1]} : vector<8x8xf32> to vector<8x1xf32>
    %cst_3 = arith.constant dense<0.000000e+00> : vector<8xf32>
    %9 = vector.multi_reduction <add>, %0, %cst_3 [1] : vector<8x256xf32> to vector<8xf32>
    %10 = vector.shape_cast %9 : vector<8xf32> to vector<8x1xf32>
    %cst_4 = arith.constant 2.560000e+02 : f32
    %11 = vector.broadcast %cst_4 : f32 to vector<8x1xf32>
    %12 = arith.divf %10, %11 : vector<8x1xf32>
    %13 = vector.broadcast %12 : vector<8x1xf32> to vector<8x256xf32>
    %14 = arith.subf %0, %13 : vector<8x256xf32>
    %15 = arith.mulf %14, %14 : vector<8x256xf32>
    %cst_5 = arith.constant dense<0.000000e+00> : vector<8xf32>
    %16 = vector.multi_reduction <add>, %15, %cst_5 [1] : vector<8x256xf32> to vector<8xf32>
    %17 = vector.shape_cast %16 : vector<8xf32> to vector<8x1xf32>
    %cst_6 = arith.constant 2.560000e+02 : f32
    %18 = vector.broadcast %cst_6 : f32 to vector<8x1xf32>
    %19 = arith.divf %17, %18 : vector<8x1xf32>
    %cst_7 = arith.constant 9.99999974E-6 : f32
    %20 = vector.broadcast %cst_7 : f32 to vector<8x1xf32>
    %21 = arith.addf %19, %20 : vector<8x1xf32>
    %22 = math.rsqrt %21 : vector<8x1xf32>
    %23 = arith.select %4, %12, %5 : vector<8x1xi1>, vector<8x1xf32>
    %24 = arith.select %4, %22, %6 : vector<8x1xi1>, vector<8x1xf32>
    %25 = arith.mulf %24, %7 : vector<8x1xf32>
    %26 = vector.broadcast %23 : vector<8x1xf32> to vector<8x256xf32>
    %27 = arith.subf %0, %26 : vector<8x256xf32>
    %28 = vector.broadcast %25 : vector<8x1xf32> to vector<8x256xf32>
    %29 = arith.mulf %27, %28 : vector<8x256xf32>
    %30 = vector.broadcast %8 : vector<8x1xf32> to vector<8x256xf32>
    %31 = arith.addf %29, %30 : vector<8x256xf32>
    %c0_8 = arith.constant 0 : index
    %c0_9 = arith.constant 0 : index
    %32 = vector.load %arg3[%c0_8, %c0_9] : memref<8x256xf32, #tpu.memory_space<vmem>>, vector<8x256xf32>
    tpu.vector_store %arg3[%c0_8, %c0_9], %31 {strides = array<i32>} : memref<8x256xf32, #tpu.memory_space<vmem>>, vector<8x256xf32>,
    return
  }
  func.func @transform_0(%arg0: i32) -> (i32, i32) {
    %c0_i32 = arith.constant 0 : i32
    %c0_i32_0 = arith.constant 0 : i32
    return %arg0, %c0_i32 : i32, i32
  }
  func.func @transform_1(%arg0: i32) -> (i32, i32) {
    %c0_i32 = arith.constant 0 : i32
    %c0_i32_0 = arith.constant 0 : i32
    return %arg0, %c0_i32 : i32, i32
  }
  func.func @transform_2(%arg0: i32) -> (i32, i32) {
    %c0_i32 = arith.constant 0 : i32
    %c0_i32_0 = arith.constant 0 : i32
    return %arg0, %c0_i32 : i32, i32
  }
}

</mosaic_0001>

<llo_original>
// kernel: ibn_forward.1
$region0: #{ibn_forward.1}
  #allocation0 [shape = 'u32[]', space=smem, size = 0x4, offset = 0x4, fixed_abs, tag = 'smem constant byte address 0x4 - core index']
  #allocation1 [shape = 'u32[144,128]{1,0:T(1,128)}', space=vmem, size = 0x12000, scoped, tag = 'internal scratch']
  %s0 = inlined_call_operand.vmem [shape: f32[8,256], index: 0, kind: input, shape index: {}]
  %s1 = inlined_call_operand.vmem [shape: f32[8,8], index: 1, kind: input, shape index: {}]
  %s2 = inlined_call_operand.vmem [shape: f32[8,256], index: 2, kind: output, shape index: {}]
  %s3 = sld [smem:[#allocation0]]
  $region18: #{ibn_forward.1} parent=0
    _
  %s5 = ssub.s32 1, %s3
  %s6 = scalar_select 0, %s5, %s3
  // Predicated region
  $region2: #{ibn_forward.1} parent=0 // pred_check
    _
  $region3: #{ibn_forward.1} parent=0 // pred_check_branch
    %8 = sbr.rel (0) target = $region5
  $region4: #{ibn_forward.1} parent=0 // pred_region
    _
  $region5: #{ibn_forward.1} parent=0 // pred_fallthru
    _
  // Predicated region
  $region6: #{ibn_forward.1} parent=0 // pred_check
    _
  $region7: #{ibn_forward.1} parent=0 // pred_check_branch
    %10 = sbr.rel (0) target = $region9
  $region8: #{ibn_forward.1} parent=0 // pred_region
    _
  $region9: #{ibn_forward.1} parent=0 // pred_fallthru
    _
  %v11 = vld [vmem:[%s0] sm:$0xff]
  %v12 = vld [vmem:[%s0 + $0x8] sm:$0xff]
  %v13 = vld [vmem:[%s1] sm:$0xff]
  %vm14 = vcmp.gt.f32.partialorder %v13, 0.5
  %v15 = vadd.f32 %v11, %v12
  %16 = vadd.xlane.f32.xlu0 %v15
  %v17 = vpop.xlane.xlu0 %16
  %v18 = vrcp.pop 256.0
  %v19 = vmul.f32 %v17, %v18
  %v20 = vsub.f32 %v11, %v19
  %v21 = vsub.f32 %v12, %v19
  %v22 = vmul.f32 %v20, %v20
  %v23 = vmul.f32 %v21, %v21
  %v24 = vadd.f32 %v22, %v23
  %25 = vadd.xlane.f32.xlu0 %v24
  %v26 = vpop.xlane.xlu0 %25
  %v27 = vmul.f32 %v26, %v18
  %v28 = vadd.f32 %v27, 1e-05
  %v29 = vrsqrt.pop %v28
  %31 = vrot.lane.b32.xlu0 %v13, 127
  %v32 = vpop.permute.xlu0 %31
  %v34 = vsel %vm14, %v19, %v32
  %35 = vrot.lane.b32.xlu0 %v13, 126
  %v36 = vpop.permute.xlu0 %35
  %v38 = vsel %vm14, %v29, %v36
  %39 = vrot.lane.b32.xlu0 %v13, 125
  %v40 = vpop.permute.xlu0 %39
  %v42 = vmul.f32 %v38, %v40
  %44 = vset.pattern.permute.xlu0 0
  %45 = vperm.xlu0 %44, %v34
  %v46 = vpop.permute.xlu0 %45
  %v48 = vsub.f32 %v11, %v46
  %v49 = vsub.f32 %v12, %v46
  %51 = vset.pattern.permute.xlu0 0
  %52 = vperm.xlu0 %51, %v42
  %v53 = vpop.permute.xlu0 %52
  %v55 = vmul.f32 %v48, %v53
  %v56 = vmul.f32 %v49, %v53
  %57 = vset.pattern.permute.xlu0 4
  %58 = vperm.xlu0 %57, %v13
  %v59 = vpop.permute.xlu0 %58
  %v61 = vadd.f32 %v55, %v59
  %v62 = vadd.f32 %v56, %v59
  %63 = vst [vmem:[%s2] sm:$0xff] %v61
  %64 = vst [vmem:[%s2 + $0x8] sm:$0xff] %v62
  // Predicated region
  $region10: #{ibn_forward.1} parent=0 // pred_check
    _
  $region11: #{ibn_forward.1} parent=0 // pred_check_branch
    %66 = sbr.rel (0) target = $region13
  $region12: #{ibn_forward.1} parent=0 // pred_region
    _
  $region13: #{ibn_forward.1} parent=0 // pred_fallthru
    _
  // Predicated region
  $region14: #{ibn_forward.1} parent=0 // pred_check
    _
  $region15: #{ibn_forward.1} parent=0 // pred_check_branch
    %68 = sbr.rel (0) target = $region17
  $region16: #{ibn_forward.1} parent=0 // pred_region
    _
  $region17: #{ibn_forward.1} parent=0 // pred_fallthru
    _

</llo_original>
